<compile_context>
chip_gen: v7x
topology: tpu7x:2x2x1
jax: 0.10.0
libtpu: 0.0.40
codegen_flags: <defaults>
</compile_context>

<pallas_src>
import functools

import jax
import jax.numpy as jnp
from jax.experimental import pallas as pl
from jax.experimental.pallas import tpu as pltpu


def _round_up(x: int, m: int) -> int:
    return (x + m - 1) // m * m


def _mlp_kernel(h_ref, w1_ref, b1_ref, w2_ref, b2_ref, out_ref):
    """Fused (Linear -> ReLU -> [folded BN] -> Linear) on one batch tile."""
    # First linear on the MXU (bf16 operands, f32 accumulation) + bias + ReLU.
    z1 = jnp.dot(h_ref[...], w1_ref[...], preferred_element_type=jnp.float32)
    a1 = jnp.maximum(z1 + b1_ref[...], 0.0)                     # [TB, Hpad] f32

    # Second linear (BN already folded into w2/b2 on the host) + bias.
    z2 = jnp.dot(a1.astype(w2_ref.dtype), w2_ref[...],
                 preferred_element_type=jnp.float32)
    out_ref[...] = (z2 + b2_ref[...]).astype(out_ref.dtype)     # [TB, Tpad]


@functools.partial(jax.jit, static_argnames=("block_b",))
def mlp_binary_classifier(h, w1, b1, gamma, beta, running_mean, running_var,
                          w2, b2, *, block_b=512):
    """Forward pass.  Weights are pre-transposed: w1 [Din,H], w2 [H,T]."""
    eps = jnp.float32(1e-5)
    B, Din = h.shape
    H = w1.shape[1]
    T = w2.shape[1]

    # ---- Fold BatchNorm1d (running stats, affine) into the second linear ----
    scale = gamma * jax.lax.rsqrt(running_var + eps)            # (1, H)
    shift = beta - running_mean * scale                         # (1, H)
    w2_f = w2 * scale.reshape(H, 1)                             # (H, T)
    b2_f = b2 + shift @ w2                                      # (1, T)

    # ---- Pad hidden / output dims to 128 lanes (zero padding is exact) ------
    Hpad = max(_round_up(H, 128), 128)
    Tpad = max(_round_up(T, 128), 128)
    w1_p = jnp.zeros((Din, Hpad), jnp.float32).at[:, :H].set(w1)
    b1_p = jnp.zeros((1, Hpad), jnp.float32).at[:, :H].set(b1)
    w2_p = jnp.zeros((Hpad, Tpad), jnp.float32).at[:H, :T].set(w2_f)
    b2_p = jnp.zeros((1, Tpad), jnp.float32).at[:, :T].set(b2_f)

    # ---- bf16 for the MXU operands; biases stay f32 --------------------------
    w1_p = w1_p.astype(jnp.bfloat16)
    w2_p = w2_p.astype(jnp.bfloat16)
    h_bf = h.astype(jnp.bfloat16)

    # ---- Batch tiling: TB multiple of 16 (bf16 sublane pack), pad tail ------
    if B <= block_b:
        TB = _round_up(max(B, 16), 16)
        Bp = TB
    else:
        TB = block_b
        Bp = _round_up(B, TB)
    h_p = jnp.pad(h_bf, ((0, Bp - B), (0, 0)))

    grid = (Bp // TB,)

    # VMEM budget: double-buffered h + out blocks + resident weights, with
    # headroom; capped at 32 MiB so it is safe on v7x (64 MiB physical VMEM).
    block_bytes = (2 * TB * Din * 2            # h tile, bf16, double-buffered
                   + 2 * TB * Tpad * 4         # out tile, f32, double-buffered
                   + Din * Hpad * 2 + Hpad * Tpad * 2
                   + (Hpad + Tpad) * 4)
    vmem_limit = int(min(max(4 * block_bytes, 8 << 20), 32 << 20))

    out_padded = pl.pallas_call(
        _mlp_kernel,
        out_shape=jax.ShapeDtypeStruct((Bp, Tpad), jnp.float32),
        grid=grid,
        in_specs=[
            pl.BlockSpec((TB, Din), lambda i: (i, 0)),      # streamed batch
            pl.BlockSpec((Din, Hpad), lambda i: (0, 0)),    # resident weights
            pl.BlockSpec((1, Hpad), lambda i: (0, 0)),
            pl.BlockSpec((Hpad, Tpad), lambda i: (0, 0)),
            pl.BlockSpec((1, Tpad), lambda i: (0, 0)),
        ],
        out_specs=pl.BlockSpec((TB, Tpad), lambda i: (i, 0)),
        compiler_params=pltpu.CompilerParams(
            dimension_semantics=("parallel",),
            vmem_limit_bytes=vmem_limit,
        ),
    )(h_p, w1_p, b1_p, w2_p, b2_p)

    return out_padded[:B, :T]


def _reference(h, w1, b1, gamma, beta, mean, var, w2, b2):
    """Pure-JAX f32 reference of the original module (inference)."""
    a1 = jnp.maximum(h @ w1 + b1, 0.0)
    a1n = (a1 - mean) / jnp.sqrt(var + 1e-5) * gamma + beta
    return a1n @ w2 + b2


if __name__ == "__main__":
    # Small shapes consistent with the module.
    B, IN_FEATS, HIDDEN, N_TASKS = 8, 32, 64, 4

    key = jax.random.PRNGKey(0)
    ks = jax.random.split(key, 8)

    # Input batch of features.
    h = jax.random.normal(ks[0], (B, IN_FEATS), dtype=jnp.float32)

    # Linear 1: PyTorch weight is [hidden, in]; stored transposed [in, hidden].
    w1 = jax.random.normal(ks[1], (IN_FEATS, HIDDEN), dtype=jnp.float32) * 0.1
    b1 = jax.random.normal(ks[2], (1, HIDDEN), dtype=jnp.float32) * 0.1

    # BatchNorm1d(hidden) affine params + running stats.
    gamma = 1.0 + 0.1 * jax.random.normal(ks[3], (1, HIDDEN), dtype=jnp.float32)
    beta = 0.1 * jax.random.normal(ks[4], (1, HIDDEN), dtype=jnp.float32)
    running_mean = 0.1 * jax.random.normal(ks[5], (1, HIDDEN), dtype=jnp.float32)
    running_var = jnp.abs(
        1.0 + 0.1 * jax.random.normal(ks[6], (1, HIDDEN), dtype=jnp.float32))

    # Linear 2: PyTorch weight is [n_tasks, hidden]; stored as [hidden, n_tasks].
    w2 = jax.random.normal(ks[7], (HIDDEN, N_TASKS), dtype=jnp.float32) * 0.1
    b2 = jnp.zeros((1, N_TASKS), dtype=jnp.float32)

    out = mlp_binary_classifier(h, w1, b1, gamma, beta, running_mean,
                                running_var, w2, b2)
    out = jax.block_until_ready(out)

    ref = _reference(h, w1, b1, gamma, beta, running_mean, running_var, w2, b2)
    assert out.shape == (B, N_TASKS), out.shape
    # bf16 MXU operands -> looser tolerance vs the f32 reference.
    assert jnp.allclose(out, ref, atol=3e-2, rtol=3e-2), (
        float(jnp.max(jnp.abs(out - ref))))

    print("KERNEL_OK")
</pallas_src>

<mosaic_0001>
module attributes {stable_mosaic.version = 11 : i64} {
  func.func @_mlp_kernel(%arg0: i32, %arg1: memref<16x32xbf16, #tpu.memory_space<vmem>>, %arg2: memref<32x128xbf16, #tpu.memory_space<vmem>>, %arg3: memref<1x128xf32, #tpu.memory_space<vmem>>, %arg4: memref<128x128xbf16, #tpu.memory_space<vmem>>, %arg5: memref<1x128xf32, #tpu.memory_space<vmem>>, %arg6: memref<16x128xf32, #tpu.memory_space<vmem>>) attributes {dimension_semantics = [#tpu.dimension_semantics<parallel>], iteration_bounds = array<i64: 1>, scalar_prefetch = 0 : i64, scratch_operands = 0 : i64, tpu.core_type = #tpu.core_type<tc>, window_params = [{transform_indices = @transform_0, window_bounds = array<i64: 16, 32>}, {pipeline_mode = #tpu.pipeline_mode<synchronous>, transform_indices = @transform_1, window_bounds = array<i64: 32, 128>}, {pipeline_mode = #tpu.pipeline_mode<synchronous>, transform_indices = @transform_2, window_bounds = array<i64: 1, 128>}, {pipeline_mode = #tpu.pipeline_mode<synchronous>, transform_indices = @transform_3, window_bounds = array<i64: 128, 128>}, {pipeline_mode = #tpu.pipeline_mode<synchronous>, transform_indices = @transform_4, window_bounds = array<i64: 1, 128>}, {transform_indices = @transform_5, window_bounds = array<i64: 16, 128>}]} {
    %c0 = arith.constant 0 : index
    %c0_0 = arith.constant 0 : index
    %0 = vector.load %arg1[%c0, %c0_0] : memref<16x32xbf16, #tpu.memory_space<vmem>>, vector<16x32xbf16>
    %c0_1 = arith.constant 0 : index
    %c0_2 = arith.constant 0 : index
    %1 = vector.load %arg2[%c0_1, %c0_2] : memref<32x128xbf16, #tpu.memory_space<vmem>>, vector<32x128xbf16>
    %cst = arith.constant dense<0.000000e+00> : vector<16x128xf32>
    %2 = tpu.matmul %0, %1, %cst {dimension_numbers = #tpu.dot_dimension_numbers<[1], [0], [0], [1], [0, 0, 1, 1], [], []>} : vector<16x32xbf16>, vector<32x128xbf16>, vector<16x128xf32> -> vector<16x128xf32>
    %c0_3 = arith.constant 0 : index
    %c0_4 = arith.constant 0 : index
    %3 = vector.load %arg3[%c0_3, %c0_4] : memref<1x128xf32, #tpu.memory_space<vmem>>, vector<1x128xf32>
    %4 = vector.broadcast %3 : vector<1x128xf32> to vector<16x128xf32>
    %5 = arith.addf %2, %4 : vector<16x128xf32>
    %cst_5 = arith.constant 0.000000e+00 : f32
    %6 = vector.broadcast %cst_5 : f32 to vector<16x128xf32>
    %7 = arith.maximumf %5, %6 : vector<16x128xf32>
    %8 = arith.truncf %7 : vector<16x128xf32> to vector<16x128xbf16>
    %c0_6 = arith.constant 0 : index
    %c0_7 = arith.constant 0 : index
    %9 = vector.load %arg4[%c0_6, %c0_7] : memref<128x128xbf16, #tpu.memory_space<vmem>>, vector<128x128xbf16>
    %cst_8 = arith.constant dense<0.000000e+00> : vector<16x128xf32>
    %10 = tpu.matmul %8, %9, %cst_8 {dimension_numbers = #tpu.dot_dimension_numbers<[1], [0], [0], [1], [0, 0, 1, 1], [], []>} : vector<16x128xbf16>, vector<128x128xbf16>, vector<16x128xf32> -> vector<16x128xf32>
    %c0_9 = arith.constant 0 : index
    %c0_10 = arith.constant 0 : index
    %11 = vector.load %arg5[%c0_9, %c0_10] : memref<1x128xf32, #tpu.memory_space<vmem>>, vector<1x128xf32>
    %12 = vector.broadcast %11 : vector<1x128xf32> to vector<16x128xf32>
    %13 = arith.addf %10, %12 : vector<16x128xf32>
    %c0_11 = arith.constant 0 : index
    %c0_12 = arith.constant 0 : index
    %14 = vector.load %arg6[%c0_11, %c0_12] : memref<16x128xf32, #tpu.memory_space<vmem>>, vector<16x128xf32>
    tpu.vector_store %arg6[%c0_11, %c0_12], %13 {strides = array<i32>} : memref<16x128xf32, #tpu.memory_space<vmem>>, vector<16x128xf32>,
    return
  }
  func.func @transform_0(%arg0: i32) -> (i32, i32) {
    %c0_i32 = arith.constant 0 : i32
    %c0_i32_0 = arith.constant 0 : i32
    return %arg0, %c0_i32 : i32, i32
  }
  func.func @transform_1(%arg0: i32) -> (i32, i32) {
    %c0_i32 = arith.constant 0 : i32
    %c0_i32_0 = arith.constant 0 : i32
    %c0_i32_1 = arith.constant 0 : i32
    return %c0_i32, %c0_i32_0 : i32, i32
  }
  func.func @transform_2(%arg0: i32) -> (i32, i32) {
    %c0_i32 = arith.constant 0 : i32
    %c0_i32_0 = arith.constant 0 : i32
    %c0_i32_1 = arith.constant 0 : i32
    return %c0_i32, %c0_i32_0 : i32, i32
  }
  func.func @transform_3(%arg0: i32) -> (i32, i32) {
    %c0_i32 = arith.constant 0 : i32
    %c0_i32_0 = arith.constant 0 : i32
    %c0_i32_1 = arith.constant 0 : i32
    return %c0_i32, %c0_i32_0 : i32, i32
  }
  func.func @transform_4(%arg0: i32) -> (i32, i32) {
    %c0_i32 = arith.constant 0 : i32
    %c0_i32_0 = arith.constant 0 : i32
    %c0_i32_1 = arith.constant 0 : i32
    return %c0_i32, %c0_i32_0 : i32, i32
  }
  func.func @transform_5(%arg0: i32) -> (i32, i32) {
    %c0_i32 = arith.constant 0 : i32
    %c0_i32_0 = arith.constant 0 : i32
    return %arg0, %c0_i32 : i32, i32
  }
}

</mosaic_0001>

<llo_original>
// kernel: mlp_binary_classifier.1
$region0: #{mlp_binary_classifier.1}
  #allocation0 [shape = 'u32[]', space=smem, size = 0x4, offset = 0x4, fixed_abs, tag = 'smem constant byte address 0x4 - core index']
  #allocation1 [shape = 'u32[144,128]{1,0:T(1,128)}', space=vmem, size = 0x12000, scoped, tag = 'internal scratch']
  %s0 = inlined_call_operand.vmem [shape: bf16[16,32], index: 0, kind: input, shape index: {}]
  %s1 = inlined_call_operand.vmem [shape: bf16[32,128], index: 1, kind: input, shape index: {}]
  %s2 = inlined_call_operand.vmem [shape: f32[1,128], index: 2, kind: input, shape index: {}]
  %s3 = inlined_call_operand.vmem [shape: bf16[128,128], index: 3, kind: input, shape index: {}]
  %s4 = inlined_call_operand.vmem [shape: f32[1,128], index: 4, kind: input, shape index: {}]
  %s5 = inlined_call_operand.vmem [shape: f32[16,128], index: 5, kind: output, shape index: {}]
  %s6 = sld [smem:[#allocation0]]
  $region30: #{mlp_binary_classifier.1} parent=0
    _
  %s8 = ssub.s32 1, %s6
  %s9 = scalar_select 0, %s8, %s6
  // Predicated region
  $region2: #{mlp_binary_classifier.1} parent=0 // pred_check
    _
  $region3: #{mlp_binary_classifier.1} parent=0 // pred_check_branch
    %11 = sbr.rel (0) target = $region5
  $region4: #{mlp_binary_classifier.1} parent=0 // pred_region
    _
  $region5: #{mlp_binary_classifier.1} parent=0 // pred_fallthru
    _
  // Predicated region
  $region6: #{mlp_binary_classifier.1} parent=0 // pred_check
    _
  $region7: #{mlp_binary_classifier.1} parent=0 // pred_check_branch
    %13 = sbr.rel (0) target = $region9
  $region8: #{mlp_binary_classifier.1} parent=0 // pred_region
    _
  $region9: #{mlp_binary_classifier.1} parent=0 // pred_fallthru
    _
  // Predicated region
  $region10: #{mlp_binary_classifier.1} parent=0 // pred_check
    _
  $region11: #{mlp_binary_classifier.1} parent=0 // pred_check_branch
    %15 = sbr.rel (0) target = $region13
  $region12: #{mlp_binary_classifier.1} parent=0 // pred_region
    _
  $region13: #{mlp_binary_classifier.1} parent=0 // pred_fallthru
    _
  // Predicated region
  $region14: #{mlp_binary_classifier.1} parent=0 // pred_check
    _
  $region15: #{mlp_binary_classifier.1} parent=0 // pred_check_branch
    %17 = sbr.rel (0) target = $region17
  $region16: #{mlp_binary_classifier.1} parent=0 // pred_region
    _
  $region17: #{mlp_binary_classifier.1} parent=0 // pred_fallthru
    _
  // Predicated region
  $region18: #{mlp_binary_classifier.1} parent=0 // pred_check
    _
  $region19: #{mlp_binary_classifier.1} parent=0 // pred_check_branch
    %19 = sbr.rel (0) target = $region21
  $region20: #{mlp_binary_classifier.1} parent=0 // pred_region
    _
  $region21: #{mlp_binary_classifier.1} parent=0 // pred_fallthru
    _
  %v21 = vld [vmem:[%s0] sm:$0xf]
  %v22 = vld [vmem:[%s0 + $0x4] sm:$0xf]
  %v23 = vld [vmem:[%s1] sm:$0xf]
  %v24 = vld [vmem:[%s1 + $0x4] sm:$0xf]
  %v25 = vld [vmem:[%s1 + $0x8] sm:$0xf]
  %v26 = vld [vmem:[%s1 + $0xc] sm:$0xf]
  %v27 = vld [vmem:[%s2] sm:$0x1]
  %v29 = vlaneseq
  %v30 = vshrl.u32 %v29, 7
  %v31 = vsub.s32 0, %v30
  %v32 = vrot.slane %v27, %v31
  %v36 = vunpack.c.l.b16 %v21
  %v37 = vunpack.c.l.b16 %v22
  %v38 = vpack.c.b16 %v37, %v36
  %v43 = vunpack.c.l.b16 %v23
  %v44 = vunpack.c.l.b16 %v24
  %v45 = vunpack.c.l.b16 %v25
  %v46 = vunpack.c.l.b16 %v26
  %v47 = vpack.c.b16 %v44, %v43
  %v48 = vpack.c.b16 %v46, %v45
  %vm51 = vcmask 261120
  %v53 = vsel %vm51, %v38, 0
  %55 = vmatprep.subr.bf16.mxu0 0
  %56 = vmatpush1.bf16.msra.mxu0 %v47
  %57 = vmatprep.subr.bf16.mxu0 0
  %58 = vmatpush1.bf16.msra.mxu0 %v48
  %59 = vmatprep.subr.bf16.mxu0 0
  %60 = vmatpush1.bf16.msra.mxu0 0
  %61 = vmatprep.subr.bf16.mxu0 0
  %62 = vmatpush1.bf16.msra.mxu0 0
  %63 = vmatprep.subr.bf16.mxu0 0
  %64 = vmatpush1.bf16.msra.mxu0 0
  %65 = vmatprep.subr.bf16.mxu0 0
  %66 = vmatpush1.bf16.msra.mxu0 0
  %67 = vmatprep.subr.bf16.mxu0 0
  %68 = vmatpush1.bf16.msra.mxu0 0
  %69 = vmatprep.subr.bf16.mxu0 0
  %70 = vmatpush1.bf16.msra.mxu0 0
  %71 = vmatprep.subr.bf16.mxu0 0
  %72 = vmatpush1.bf16.msra.mxu0 0
  %73 = vmatprep.subr.bf16.mxu0 0
  %74 = vmatpush1.bf16.msra.mxu0 0
  %75 = vmatprep.subr.bf16.mxu0 0
  %76 = vmatpush1.bf16.msra.mxu0 0
  %77 = vmatprep.subr.bf16.mxu0 0
  %78 = vmatpush1.bf16.msra.mxu0 0
  %79 = vmatprep.subr.bf16.mxu0 0
  %80 = vmatpush1.bf16.msra.mxu0 0
  %81 = vmatprep.subr.bf16.mxu0 0
  %82 = vmatpush1.bf16.msra.mxu0 0
  %83 = vmatprep.subr.bf16.mxu0 0
  %84 = vmatpush1.bf16.msra.mxu0 0
  %85 = vmatprep.subr.bf16.mxu0 0
  %86 = vmatpush1.bf16.msra.mxu0 0
  %87 = vmatprep.mubr.bf16.mxu0 0
  %88 = vmatmul.mubr.bf16.gmra.mrb[0].mxu0 %v53
  %v89 = vpop.f32.mrb[0].mxu0
  %v90 = vadd.f32 %v32, %v89
  %v91 = vpop.f32.mrb[0].mxu0
  %v92 = vpop.f32.mrb[0].mxu0
  %v93 = vadd.f32 %v32, %v92
  %v94 = vpop.f32.mrb[0].mxu0
  %95 = vdwg.mxu0
  %v96 = vmax.f32 %v90, 0.0
  %v97 = vmax.f32 %v93, 0.0
  %v98 = vpack.c.bf16 %v97, %v96
  %v99 = vld [vmem:[%s3] sm:$0xf]
  %v100 = vld [vmem:[%s3 + $0x4] sm:$0xf]
  %v101 = vld [vmem:[%s3 + $0x8] sm:$0xf]
  %v102 = vld [vmem:[%s3 + $0xc] sm:$0xf]
  %v103 = vld [vmem:[%s3 + $0x10] sm:$0xf]
  %v104 = vld [vmem:[%s3 + $0x14] sm:$0xf]
  %v105 = vld [vmem:[%s3 + $0x18] sm:$0xf]
  %v106 = vld [vmem:[%s3 + $0x1c] sm:$0xf]
  %v107 = vld [vmem:[%s3 + $0x20] sm:$0xf]
  %v108 = vld [vmem:[%s3 + $0x24] sm:$0xf]
  %v109 = vld [vmem:[%s3 + $0x28] sm:$0xf]
  %v110 = vld [vmem:[%s3 + $0x2c] sm:$0xf]
  %v111 = vld [vmem:[%s3 + $0x30] sm:$0xf]
  %v112 = vld [vmem:[%s3 + $0x34] sm:$0xf]
  %v113 = vld [vmem:[%s3 + $0x38] sm:$0xf]
  %v114 = vld [vmem:[%s3 + $0x3c] sm:$0xf]
  %v115 = vld [vmem:[%s4] sm:$0x1]
  %v117 = vlaneseq
  %v118 = vshrl.u32 %v117, 7
  %v119 = vsub.s32 0, %v118
  %v120 = vrot.slane %v115, %v119
  %v138 = vunpack.c.l.b16 %v99
  %v139 = vunpack.c.l.b16 %v100
  %v140 = vunpack.c.l.b16 %v101
  %v141 = vunpack.c.l.b16 %v102
  %v142 = vunpack.c.l.b16 %v103
  %v143 = vunpack.c.l.b16 %v104
  %v144 = vunpack.c.l.b16 %v105
  %v145 = vunpack.c.l.b16 %v106
  %v146 = vunpack.c.l.b16 %v107
  %v147 = vunpack.c.l.b16 %v108
  %v148 = vunpack.c.l.b16 %v109
  %v149 = vunpack.c.l.b16 %v110
  %v150 = vunpack.c.l.b16 %v111
  %v151 = vunpack.c.l.b16 %v112
  %v152 = vunpack.c.l.b16 %v113
  %v153 = vunpack.c.l.b16 %v114
  %v154 = vpack.c.b16 %v139, %v138
  %v155 = vpack.c.b16 %v141, %v140
  %v156 = vpack.c.b16 %v143, %v142
  %v157 = vpack.c.b16 %v145, %v144
  %v158 = vpack.c.b16 %v147, %v146
  %v159 = vpack.c.b16 %v149, %v148
  %v160 = vpack.c.b16 %v151, %v150
  %v161 = vpack.c.b16 %v153, %v152
  %170 = vmatprep.subr.bf16.mxu0 0
  %171 = vmatpush1.bf16.msra.mxu0 %v154
  %172 = vmatprep.subr.bf16.mxu0 0
  %173 = vmatpush1.bf16.msra.mxu0 %v155
  %174 = vmatprep.subr.bf16.mxu0 0
  %175 = vmatpush1.bf16.msra.mxu0 %v156
  %176 = vmatprep.subr.bf16.mxu0 0
  %177 = vmatpush1.bf16.msra.mxu0 %v157
  %178 = vmatprep.subr.bf16.mxu0 0
  %179 = vmatpush1.bf16.msra.mxu0 %v158
  %180 = vmatprep.subr.bf16.mxu0 0
  %181 = vmatpush1.bf16.msra.mxu0 %v159
  %182 = vmatprep.subr.bf16.mxu0 0
  %183 = vmatpush1.bf16.msra.mxu0 %v160
  %184 = vmatprep.subr.bf16.mxu0 0
  %185 = vmatpush1.bf16.msra.mxu0 %v161
  %186 = vmatprep.subr.bf16.mxu0 0
  %187 = vmatpush1.bf16.msra.mxu0 0
  %188 = vmatprep.subr.bf16.mxu0 0
  %189 = vmatpush1.bf16.msra.mxu0 0
  %190 = vmatprep.subr.bf16.mxu0 0
  %191 = vmatpush1.bf16.msra.mxu0 0
  %192 = vmatprep.subr.bf16.mxu0 0
  %193 = vmatpush1.bf16.msra.mxu0 0
  %194 = vmatprep.subr.bf16.mxu0 0
  %195 = vmatpush1.bf16.msra.mxu0 0
  %196 = vmatprep.subr.bf16.mxu0 0
  %197 = vmatpush1.bf16.msra.mxu0 0
  %198 = vmatprep.subr.bf16.mxu0 0
  %199 = vmatpush1.bf16.msra.mxu0 0
  %200 = vmatprep.subr.bf16.mxu0 0
  %201 = vmatpush1.bf16.msra.mxu0 0
  %202 = vmatprep.mubr.bf16.mxu0 0
  %203 = vmatmul.mubr.bf16.gmra.mrb[0].mxu0 %v98
  %v204 = vpop.f32.mrb[0].mxu0
  %v205 = vadd.f32 %v120, %v204
  %v206 = vpop.f32.mrb[0].mxu0
  %v207 = vpop.f32.mrb[0].mxu0
  %v208 = vadd.f32 %v120, %v207
  %v209 = vpop.f32.mrb[0].mxu0
  %210 = vdwg.mxu0
  %211 = vst [vmem:[%s5] sm:$0xff] %v205
  %212 = vst [vmem:[%s5 + $0x8] sm:$0xff] %v208
  // Predicated region
  $region22: #{mlp_binary_classifier.1} parent=0 // pred_check
    _
  $region23: #{mlp_binary_classifier.1} parent=0 // pred_check_branch
    %214 = sbr.rel (0) target = $region25
  $region24: #{mlp_binary_classifier.1} parent=0 // pred_region
    _
  $region25: #{mlp_binary_classifier.1} parent=0 // pred_fallthru
    _
  // Predicated region
  $region26: #{mlp_binary_classifier.1} parent=0 // pred_check
    _
  $region27: #{mlp_binary_classifier.1} parent=0 // pred_check_branch
    %216 = sbr.rel (0) target = $region29
  $region28: #{mlp_binary_classifier.1} parent=0 // pred_region
    _
  $region29: #{mlp_binary_classifier.1} parent=0 // pred_fallthru
    _

</llo_original>
